<compile_context>
chip_gen: v5e
topology: v5e:2x2
jax: 0.10.0
libtpu: 0.0.40
codegen_flags: <defaults>
</compile_context>

<pallas_src>
import functools

import jax
import jax.numpy as jnp
from jax.experimental import pallas as pl
from jax.experimental.pallas import tpu as pltpu


def _round_up(x, m):
    return ((x + m - 1) // m) * m


def _make_fused_mlp_kernel(num_layers):
    """Kernel: h = relu(x W1 + b1) -> ... -> x WL + bL (no relu on last).

    Weights are the fused (all-objective) matrices, so every layer is a single
    matmul on the MXU followed by one broadcast bias add (+ relu) on the VPU.
    """

    def kernel(x_ref, *rest):
        *param_refs, o_ref = rest
        h = x_ref[...].astype(jnp.float32)
        for l in range(num_layers):
            w = param_refs[2 * l][...]          # (d_in_total, d_out_total)
            b = param_refs[2 * l + 1][...]      # (1, d_out_total)
            h = jnp.dot(h, w, preferred_element_type=jnp.float32) + b
            if l < num_layers - 1:
                h = jnp.maximum(h, 0.0)         # torch.relu
        o_ref[...] = h.astype(o_ref.dtype)

    return kernel


def _fuse_params(params):
    """Fuse per-objective params into wide / block-diagonal matrices.

    params: list of (W, b) with W:(n_obj, d_in, d_out), b:(n_obj, 1, d_out).
    Returns list of (W_fused, b_fused):
      layer 0:   W_fused (d_in, n_obj*d_out)            (x shared -> concat cols)
      layer l>0: W_fused (n_obj*d_in, n_obj*d_out)      (block diagonal)
      all:       b_fused (1, n_obj*d_out)
    Column block o of every layer corresponds to objective o.
    """
    n_obj = params[0][0].shape[0]
    fused = []
    for l, (W, b) in enumerate(params):
        d_in, d_out = W.shape[1], W.shape[2]
        if l == 0:
            # (n_obj, d_in, d_out) -> (d_in, n_obj, d_out) -> (d_in, n_obj*d_out)
            W_f = jnp.transpose(W, (1, 0, 2)).reshape(d_in, n_obj * d_out)
        else:
            # Block diagonal: M[o*d_in + i, p*d_out + j] = W[o,i,j] * (o == p)
            eye = jnp.eye(n_obj, dtype=W.dtype)
            blk = jnp.einsum("op,oij->oipj", eye, W)
            W_f = blk.reshape(n_obj * d_in, n_obj * d_out)
        b_f = jnp.transpose(b, (1, 0, 2)).reshape(1, n_obj * d_out)
        fused.append((W_f, b_f))
    return fused


def dqn_network_forward(x, params, *, batch_tile=256):
    """Forward pass matching DQN_Network.forward.

    x: (B, n_observations) float32
    params: list of (W, b) with W:(n_obj, d_in, d_out), b:(n_obj, 1, d_out)
    returns (B, n_objectives, n_actions) float32 (== torch.stack(dim=1)).
    """
    B, n_obs = x.shape
    n_obj = params[0][0].shape[0]
    n_actions = params[-1][0].shape[-1]
    num_layers = len(params)
    d_out_total = n_obj * n_actions

    fused = _fuse_params(params)

    # Pad batch to a sublane multiple (8).  Only tile the batch when it is
    # large; otherwise the whole problem is a single grid step.
    B_pad = _round_up(max(B, 8), 8)
    if B_pad > batch_tile:
        tb = batch_tile                      # multiple of 8 by construction
        B_pad = _round_up(B_pad, tb)
    else:
        tb = B_pad
    if B_pad != B:
        x = jnp.pad(x, ((0, B_pad - B), (0, 0)))
    n_tiles = B_pad // tb

    flat_args = [x]
    in_specs = [pl.BlockSpec((tb, n_obs), lambda i: (i, 0))]
    for (W_f, b_f) in fused:
        flat_args.append(W_f)
        flat_args.append(b_f)
        # Full-array blocks: same (0, 0) block every grid step -> weights stay
        # resident in VMEM (total footprint here is a few tens of KB).
        in_specs.append(pl.BlockSpec(W_f.shape, lambda i: (0, 0)))
        in_specs.append(pl.BlockSpec(b_f.shape, lambda i: (0, 0)))

    out = pl.pallas_call(
        _make_fused_mlp_kernel(num_layers),
        grid=(n_tiles,),
        in_specs=in_specs,
        out_specs=pl.BlockSpec((tb, d_out_total), lambda i: (i, 0)),
        out_shape=jax.ShapeDtypeStruct((B_pad, d_out_total), jnp.float32),
        compiler_params=pltpu.CompilerParams(
            dimension_semantics=("parallel",)),  # batch tiles shard across TCs
    )(*flat_args)

    # Lane-dense kernel output (B, n_obj*n_actions) -> torch.stack(dim=1) layout.
    return out[:B].reshape(B, n_obj, n_actions)


def init_params(key, n_observations, n_actions, n_objectives, hidden_sizes):
    """Deterministic init mimicking nn.Linear's uniform(-1/sqrt(fan_in), ...)."""
    sizes = [n_observations] + list(hidden_sizes) + [n_actions]
    params = []
    for l in range(len(sizes) - 1):
        d_in, d_out = sizes[l], sizes[l + 1]
        key, kw, kb = jax.random.split(key, 3)
        bound = 1.0 / jnp.sqrt(jnp.float32(d_in))
        W = jax.random.uniform(kw, (n_objectives, d_in, d_out),
                               minval=-bound, maxval=bound, dtype=jnp.float32)
        b = jax.random.uniform(kb, (n_objectives, 1, d_out),
                               minval=-bound, maxval=bound, dtype=jnp.float32)
        params.append((W, b))
    return params


def _reference_forward(x, params):
    """Pure-JAX reference matching the PyTorch module semantics."""
    n_obj = params[0][0].shape[0]
    outs = []
    for i in range(n_obj):
        h = x
        for l, (W, b) in enumerate(params):
            h = h @ W[i] + b[i][0]
            if l < len(params) - 1:
                h = jnp.maximum(h, 0.0)
        outs.append(h)
    return jnp.stack(outs, axis=1)


if __name__ == "__main__":
    # Small shapes consistent with the module's forward.
    n_observations = 16
    n_actions = 8
    n_objectives = 3
    hidden_sizes = [32, 32]
    batch = 4

    key = jax.random.PRNGKey(0)
    key, kx = jax.random.split(key)
    x = jax.random.normal(kx, (batch, n_observations), dtype=jnp.float32)
    params = init_params(key, n_observations, n_actions, n_objectives,
                         hidden_sizes)

    fwd = jax.jit(functools.partial(dqn_network_forward))
    out = fwd(x, params)
    out = jax.block_until_ready(out)

    ref = _reference_forward(x, params)
    assert out.shape == (batch, n_objectives, n_actions), out.shape
    assert jnp.allclose(out, ref, atol=1e-5, rtol=1e-5), "mismatch vs reference"

    print("KERNEL_OK")
</pallas_src>

<mosaic_0001>
module attributes {stable_mosaic.version = 11 : i64} {
  func.func @kernel(%arg0: i32, %arg1: memref<8x16xf32, #tpu.memory_space<vmem>>, %arg2: memref<16x96xf32, #tpu.memory_space<vmem>>, %arg3: memref<1x96xf32, #tpu.memory_space<vmem>>, %arg4: memref<96x96xf32, #tpu.memory_space<vmem>>, %arg5: memref<1x96xf32, #tpu.memory_space<vmem>>, %arg6: memref<96x24xf32, #tpu.memory_space<vmem>>, %arg7: memref<1x24xf32, #tpu.memory_space<vmem>>, %arg8: memref<8x24xf32, #tpu.memory_space<vmem>>) attributes {dimension_semantics = [#tpu.dimension_semantics<parallel>], iteration_bounds = array<i64: 1>, scalar_prefetch = 0 : i64, scratch_operands = 0 : i64, tpu.core_type = #tpu.core_type<tc>, window_params = [{transform_indices = @transform_0, window_bounds = array<i64: 8, 16>}, {pipeline_mode = #tpu.pipeline_mode<synchronous>, transform_indices = @transform_1, window_bounds = array<i64: 16, 96>}, {pipeline_mode = #tpu.pipeline_mode<synchronous>, transform_indices = @transform_2, window_bounds = array<i64: 1, 96>}, {pipeline_mode = #tpu.pipeline_mode<synchronous>, transform_indices = @transform_3, window_bounds = array<i64: 96, 96>}, {pipeline_mode = #tpu.pipeline_mode<synchronous>, transform_indices = @transform_4, window_bounds = array<i64: 1, 96>}, {pipeline_mode = #tpu.pipeline_mode<synchronous>, transform_indices = @transform_5, window_bounds = array<i64: 96, 24>}, {pipeline_mode = #tpu.pipeline_mode<synchronous>, transform_indices = @transform_6, window_bounds = array<i64: 1, 24>}, {transform_indices = @transform_7, window_bounds = array<i64: 8, 24>}]} {
    %c0 = arith.constant 0 : index
    %c0_0 = arith.constant 0 : index
    %0 = vector.load %arg1[%c0, %c0_0] : memref<8x16xf32, #tpu.memory_space<vmem>>, vector<8x16xf32>
    %c0_1 = arith.constant 0 : index
    %c0_2 = arith.constant 0 : index
    %1 = vector.load %arg2[%c0_1, %c0_2] : memref<16x96xf32, #tpu.memory_space<vmem>>, vector<16x96xf32>
    %c0_3 = arith.constant 0 : index
    %c0_4 = arith.constant 0 : index
    %2 = vector.load %arg3[%c0_3, %c0_4] : memref<1x96xf32, #tpu.memory_space<vmem>>, vector<1x96xf32>
    %cst = arith.constant dense<0.000000e+00> : vector<8x96xf32>
    %3 = tpu.matmul %0, %1, %cst {dimension_numbers = #tpu.dot_dimension_numbers<[1], [0], [0], [1], [0, 0, 1, 1], [], []>} : vector<8x16xf32>, vector<16x96xf32>, vector<8x96xf32> -> vector<8x96xf32>
    %4 = vector.broadcast %2 : vector<1x96xf32> to vector<8x96xf32>
    %5 = arith.addf %3, %4 : vector<8x96xf32>
    %cst_5 = arith.constant 0.000000e+00 : f32
    %6 = vector.broadcast %cst_5 : f32 to vector<8x96xf32>
    %7 = arith.maximumf %5, %6 : vector<8x96xf32>
    %c0_6 = arith.constant 0 : index
    %c0_7 = arith.constant 0 : index
    %8 = vector.load %arg4[%c0_6, %c0_7] : memref<96x96xf32, #tpu.memory_space<vmem>>, vector<96x96xf32>
    %c0_8 = arith.constant 0 : index
    %c0_9 = arith.constant 0 : index
    %9 = vector.load %arg5[%c0_8, %c0_9] : memref<1x96xf32, #tpu.memory_space<vmem>>, vector<1x96xf32>
    %cst_10 = arith.constant dense<0.000000e+00> : vector<8x96xf32>
    %10 = tpu.matmul %7, %8, %cst_10 {dimension_numbers = #tpu.dot_dimension_numbers<[1], [0], [0], [1], [0, 0, 1, 1], [], []>} : vector<8x96xf32>, vector<96x96xf32>, vector<8x96xf32> -> vector<8x96xf32>
    %11 = vector.broadcast %9 : vector<1x96xf32> to vector<8x96xf32>
    %12 = arith.addf %10, %11 : vector<8x96xf32>
    %cst_11 = arith.constant 0.000000e+00 : f32
    %13 = vector.broadcast %cst_11 : f32 to vector<8x96xf32>
    %14 = arith.maximumf %12, %13 : vector<8x96xf32>
    %c0_12 = arith.constant 0 : index
    %c0_13 = arith.constant 0 : index
    %15 = vector.load %arg6[%c0_12, %c0_13] : memref<96x24xf32, #tpu.memory_space<vmem>>, vector<96x24xf32>
    %c0_14 = arith.constant 0 : index
    %c0_15 = arith.constant 0 : index
    %16 = vector.load %arg7[%c0_14, %c0_15] : memref<1x24xf32, #tpu.memory_space<vmem>>, vector<1x24xf32>
    %cst_16 = arith.constant dense<0.000000e+00> : vector<8x24xf32>
    %17 = tpu.matmul %14, %15, %cst_16 {dimension_numbers = #tpu.dot_dimension_numbers<[1], [0], [0], [1], [0, 0, 1, 1], [], []>} : vector<8x96xf32>, vector<96x24xf32>, vector<8x24xf32> -> vector<8x24xf32>
    %18 = vector.broadcast %16 : vector<1x24xf32> to vector<8x24xf32>
    %19 = arith.addf %17, %18 : vector<8x24xf32>
    %c0_17 = arith.constant 0 : index
    %c0_18 = arith.constant 0 : index
    %20 = vector.load %arg8[%c0_17, %c0_18] : memref<8x24xf32, #tpu.memory_space<vmem>>, vector<8x24xf32>
    tpu.vector_store %arg8[%c0_17, %c0_18], %19 {strides = array<i32>} : memref<8x24xf32, #tpu.memory_space<vmem>>, vector<8x24xf32>,
    return
  }
  func.func @transform_0(%arg0: i32) -> (i32, i32) {
    %c0_i32 = arith.constant 0 : i32
    %c0_i32_0 = arith.constant 0 : i32
    return %arg0, %c0_i32 : i32, i32
  }
  func.func @transform_1(%arg0: i32) -> (i32, i32) {
    %c0_i32 = arith.constant 0 : i32
    %c0_i32_0 = arith.constant 0 : i32
    %c0_i32_1 = arith.constant 0 : i32
    return %c0_i32, %c0_i32_0 : i32, i32
  }
  func.func @transform_2(%arg0: i32) -> (i32, i32) {
    %c0_i32 = arith.constant 0 : i32
    %c0_i32_0 = arith.constant 0 : i32
    %c0_i32_1 = arith.constant 0 : i32
    return %c0_i32, %c0_i32_0 : i32, i32
  }
  func.func @transform_3(%arg0: i32) -> (i32, i32) {
    %c0_i32 = arith.constant 0 : i32
    %c0_i32_0 = arith.constant 0 : i32
    %c0_i32_1 = arith.constant 0 : i32
    return %c0_i32, %c0_i32_0 : i32, i32
  }
  func.func @transform_4(%arg0: i32) -> (i32, i32) {
    %c0_i32 = arith.constant 0 : i32
    %c0_i32_0 = arith.constant 0 : i32
    %c0_i32_1 = arith.constant 0 : i32
    return %c0_i32, %c0_i32_0 : i32, i32
  }
  func.func @transform_5(%arg0: i32) -> (i32, i32) {
    %c0_i32 = arith.constant 0 : i32
    %c0_i32_0 = arith.constant 0 : i32
    %c0_i32_1 = arith.constant 0 : i32
    return %c0_i32, %c0_i32_0 : i32, i32
  }
  func.func @transform_6(%arg0: i32) -> (i32, i32) {
    %c0_i32 = arith.constant 0 : i32
    %c0_i32_0 = arith.constant 0 : i32
    %c0_i32_1 = arith.constant 0 : i32
    return %c0_i32, %c0_i32_0 : i32, i32
  }
  func.func @transform_7(%arg0: i32) -> (i32, i32) {
    %c0_i32 = arith.constant 0 : i32
    %c0_i32_0 = arith.constant 0 : i32
    return %arg0, %c0_i32 : i32, i32
  }
}

</mosaic_0001>

<llo_original>
// kernel: dqn_network_forward.1
$region0: #{dqn_network_forward.1}
  #allocation0 [shape = 'u32[]', space=smem, size = 0x4, offset = 0x4, fixed_abs, tag = 'smem constant byte address 0x4 - core index']
  #allocation1 [shape = 'u32[72,128]{1,0:T(1,128)}', space=vmem, size = 0x9000, scoped, tag = 'internal scratch']
  %s0 = inlined_call_operand.vmem [shape: f32[8,16], index: 0, kind: input, shape index: {}]
  %s1 = inlined_call_operand.vmem [shape: f32[16,96], index: 1, kind: input, shape index: {}]
  %s2 = inlined_call_operand.vmem [shape: f32[1,96], index: 2, kind: input, shape index: {}]
  %s3 = inlined_call_operand.vmem [shape: f32[96,96], index: 3, kind: input, shape index: {}]
  %s4 = inlined_call_operand.vmem [shape: f32[1,96], index: 4, kind: input, shape index: {}]
  %s5 = inlined_call_operand.vmem [shape: f32[96,24], index: 5, kind: input, shape index: {}]
  %s6 = inlined_call_operand.vmem [shape: f32[1,24], index: 6, kind: input, shape index: {}]
  %s7 = inlined_call_operand.vmem [shape: f32[8,24], index: 7, kind: output, shape index: {}]
  %s8 = sld [smem:[#allocation0]]
  $region38: #{dqn_network_forward.1} parent=0
    _
  %s10 = ssub.s32 1, %s8
  %s11 = scalar_select 0, %s10, %s8
  // Predicated region
  $region2: #{dqn_network_forward.1} parent=0 // pred_check
    _
  $region3: #{dqn_network_forward.1} parent=0 // pred_check_branch
    %13 = sbr.rel (0) target = $region5
  $region4: #{dqn_network_forward.1} parent=0 // pred_region
    _
  $region5: #{dqn_network_forward.1} parent=0 // pred_fallthru
    _
  // Predicated region
  $region6: #{dqn_network_forward.1} parent=0 // pred_check
    _
  $region7: #{dqn_network_forward.1} parent=0 // pred_check_branch
    %15 = sbr.rel (0) target = $region9
  $region8: #{dqn_network_forward.1} parent=0 // pred_region
    _
  $region9: #{dqn_network_forward.1} parent=0 // pred_fallthru
    _
  // Predicated region
  $region10: #{dqn_network_forward.1} parent=0 // pred_check
    _
  $region11: #{dqn_network_forward.1} parent=0 // pred_check_branch
    %17 = sbr.rel (0) target = $region13
  $region12: #{dqn_network_forward.1} parent=0 // pred_region
    _
  $region13: #{dqn_network_forward.1} parent=0 // pred_fallthru
    _
  // Predicated region
  $region14: #{dqn_network_forward.1} parent=0 // pred_check
    _
  $region15: #{dqn_network_forward.1} parent=0 // pred_check_branch
    %19 = sbr.rel (0) target = $region17
  $region16: #{dqn_network_forward.1} parent=0 // pred_region
    _
  $region17: #{dqn_network_forward.1} parent=0 // pred_fallthru
    _
  // Predicated region
  $region18: #{dqn_network_forward.1} parent=0 // pred_check
    _
  $region19: #{dqn_network_forward.1} parent=0 // pred_check_branch
    %21 = sbr.rel (0) target = $region21
  $region20: #{dqn_network_forward.1} parent=0 // pred_region
    _
  $region21: #{dqn_network_forward.1} parent=0 // pred_fallthru
    _
  // Predicated region
  $region22: #{dqn_network_forward.1} parent=0 // pred_check
    _
  $region23: #{dqn_network_forward.1} parent=0 // pred_check_branch
    %23 = sbr.rel (0) target = $region25
  $region24: #{dqn_network_forward.1} parent=0 // pred_region
    _
  $region25: #{dqn_network_forward.1} parent=0 // pred_fallthru
    _
  // Predicated region
  $region26: #{dqn_network_forward.1} parent=0 // pred_check
    _
  $region27: #{dqn_network_forward.1} parent=0 // pred_check_branch
    %25 = sbr.rel (0) target = $region29
  $region28: #{dqn_network_forward.1} parent=0 // pred_region
    _
  $region29: #{dqn_network_forward.1} parent=0 // pred_fallthru
    _
  %v26 = vld [vmem:[%s0] sm:$0xff]
  %v27 = vld [vmem:[%s1] sm:$0xff]
  %v28 = vld [vmem:[%s1 + $0x8] sm:$0xff]
  %v29 = vld [vmem:[%s2] sm:$0x1]
  %v31 = vperm.slane %v29, 0
  %vm33 = vcmask 130048
  %v35 = vsel %vm33, %v26, 0
  %37 = vmatpush.msra.mxu0 0.0
  %38 = vmatpush.msra.mxu0 0.0
  %39 = vmatpush.msra.mxu0 0.0
  %40 = vmatpush.msra.mxu0 0.0
  %41 = vmatpush.msra.mxu0 0.0
  %42 = vmatpush.msra.mxu0 0.0
  %43 = vmatpush.msra.mxu0 0.0
  %44 = vmatpush.msra.mxu0 0.0
  %45 = vmatpush.msra.mxu0 0.0
  %46 = vmatpush.msra.mxu0 0.0
  %47 = vmatpush.msra.mxu0 0.0
  %48 = vmatpush.msra.mxu0 0.0
  %49 = vmatpush.msra.mxu0 0.0
  %50 = vmatpush.msra.mxu0 0.0
  %51 = vmatpush.msra.mxu0 %v28
  %52 = vmatpush.msra.mxu0 %v27
  %53 = vmatmul.f32.gmra.mxu0 %v35
  %v54 = vpop.f32.mrf.mxu0
  %v55 = vadd.f32 %v31, %v54
  %56 = vdwg.mxu0
  %v57 = vmax.f32 %v55, 0.0
  %v58 = vld [vmem:[%s3] sm:$0xff]
  %v59 = vld [vmem:[%s3 + $0x8] sm:$0xff]
  %v60 = vld [vmem:[%s3 + $0x10] sm:$0xff]
  %v61 = vld [vmem:[%s3 + $0x18] sm:$0xff]
  %v62 = vld [vmem:[%s3 + $0x20] sm:$0xff]
  %v63 = vld [vmem:[%s3 + $0x28] sm:$0xff]
  %v64 = vld [vmem:[%s3 + $0x30] sm:$0xff]
  %v65 = vld [vmem:[%s3 + $0x38] sm:$0xff]
  %v66 = vld [vmem:[%s3 + $0x40] sm:$0xff]
  %v67 = vld [vmem:[%s3 + $0x48] sm:$0xff]
  %v68 = vld [vmem:[%s3 + $0x50] sm:$0xff]
  %v69 = vld [vmem:[%s3 + $0x58] sm:$0xff]
  %v70 = vld [vmem:[%s4] sm:$0x1]
  %v72 = vperm.slane %v70, 0
  %vm74 = vcmask 785408
  %v76 = vsel %vm74, %v57, 0
  %78 = vmatpush.msra.mxu0 0.0
  %79 = vmatpush.msra.mxu0 0.0
  %80 = vmatpush.msra.mxu0 0.0
  %81 = vmatpush.msra.mxu0 0.0
  %82 = vmatpush.msra.mxu0 %v69
  %83 = vmatpush.msra.mxu0 %v68
  %84 = vmatpush.msra.mxu0 %v67
  %85 = vmatpush.msra.mxu0 %v66
  %86 = vmatpush.msra.mxu0 %v65
  %87 = vmatpush.msra.mxu0 %v64
  %88 = vmatpush.msra.mxu0 %v63
  %89 = vmatpush.msra.mxu0 %v62
  %90 = vmatpush.msra.mxu0 %v61
  %91 = vmatpush.msra.mxu0 %v60
  %92 = vmatpush.msra.mxu0 %v59
  %93 = vmatpush.msra.mxu0 %v58
  %94 = vmatmul.f32.gmra.mxu0 %v76
  %v95 = vpop.f32.mrf.mxu0
  %v96 = vadd.f32 %v72, %v95
  %97 = vdwg.mxu0
  %v98 = vmax.f32 %v96, 0.0
  %v99 = vld [vmem:[%s5] sm:$0xff]
  %v100 = vld [vmem:[%s5 + $0x8] sm:$0xff]
  %v101 = vld [vmem:[%s5 + $0x10] sm:$0xff]
  %v102 = vld [vmem:[%s5 + $0x18] sm:$0xff]
  %v103 = vld [vmem:[%s5 + $0x20] sm:$0xff]
  %v104 = vld [vmem:[%s5 + $0x28] sm:$0xff]
  %v105 = vld [vmem:[%s5 + $0x30] sm:$0xff]
  %v106 = vld [vmem:[%s5 + $0x38] sm:$0xff]
  %v107 = vld [vmem:[%s5 + $0x40] sm:$0xff]
  %v108 = vld [vmem:[%s5 + $0x48] sm:$0xff]
  %v109 = vld [vmem:[%s5 + $0x50] sm:$0xff]
  %v110 = vld [vmem:[%s5 + $0x58] sm:$0xff]
  %v111 = vld [vmem:[%s6] sm:$0x1]
  %v113 = vperm.slane %v111, 0
  %v116 = vsel %vm74, %v98, 0
  %118 = vmatpush.msra.mxu0 0.0
  %119 = vmatpush.msra.mxu0 0.0
  %120 = vmatpush.msra.mxu0 0.0
  %121 = vmatpush.msra.mxu0 0.0
  %122 = vmatpush.msra.mxu0 %v110
  %123 = vmatpush.msra.mxu0 %v109
  %124 = vmatpush.msra.mxu0 %v108
  %125 = vmatpush.msra.mxu0 %v107
  %126 = vmatpush.msra.mxu0 %v106
  %127 = vmatpush.msra.mxu0 %v105
  %128 = vmatpush.msra.mxu0 %v104
  %129 = vmatpush.msra.mxu0 %v103
  %130 = vmatpush.msra.mxu0 %v102
  %131 = vmatpush.msra.mxu0 %v101
  %132 = vmatpush.msra.mxu0 %v100
  %133 = vmatpush.msra.mxu0 %v99
  %134 = vmatmul.f32.gmra.mxu0 %v116
  %v135 = vpop.f32.mrf.mxu0
  %v136 = vadd.f32 %v113, %v135
  %137 = vdwg.mxu0
  %vm138 = vcmask 195584
  %139 = vst.msk [vmem:[%s7] sm:$0xff] %vm138, %v136
  // Predicated region
  $region30: #{dqn_network_forward.1} parent=0 // pred_check
    _
  $region31: #{dqn_network_forward.1} parent=0 // pred_check_branch
    %141 = sbr.rel (0) target = $region33
  $region32: #{dqn_network_forward.1} parent=0 // pred_region
    _
  $region33: #{dqn_network_forward.1} parent=0 // pred_fallthru
    _
  // Predicated region
  $region34: #{dqn_network_forward.1} parent=0 // pred_check
    _
  $region35: #{dqn_network_forward.1} parent=0 // pred_check_branch
    %143 = sbr.rel (0) target = $region37
  $region36: #{dqn_network_forward.1} parent=0 // pred_region
    _
  $region37: #{dqn_network_forward.1} parent=0 // pred_fallthru
    _

</llo_original>
